<compile_context>
chip_gen: v7x
topology: tpu7x:2x2x1
jax: 0.10.0
libtpu: 0.0.40
codegen_flags: <defaults>
</compile_context>

<pallas_src>
import jax
import jax.numpy as jnp
from jax.experimental import pallas as pl
from jax.experimental.pallas import tpu as pltpu


HIDDEN = 10  # fc1 output width (matches nn.Linear(num_features, 10))


def _round_up(n, m):
    return ((n + m - 1) // m) * m


def simscore_kernel(x_ref, w_ref, b_ref, o_ref):
    # x_ref: (TB, F) f32, w_ref: (F, 10) f32, b_ref: (1, 10) f32,
    # o_ref: (TB, 10) f32/bf16
    z = jnp.dot(x_ref[...], w_ref[...], preferred_element_type=jnp.float32)
    z = z + b_ref[...]                      # broadcast bias over batch rows
    # TODO(synk): training-mode Dropout(0.5) omitted (eval semantics = identity);
    # would need pltpu.prng_seed + pltpu.prng_random_bits with 1/(1-p) scaling.
    o_ref[...] = jax.nn.sigmoid(z).astype(o_ref.dtype)


def _choose_tb(B, F, x_itemsize, out_itemsize, *,
               target_tile_bytes, vmem_budget_bytes):
    """Pick a batch-tile size in rows, sized by bytes rather than a fixed count."""
    sub = 8  # f32 sublane multiple (second-to-last dim)

    # Rows such that one X tile is roughly target_tile_bytes.
    tb = _round_up(max(target_tile_bytes // max(F * x_itemsize, 1), 1), sub)

    # Keep 2-deep double-buffered X + output tiles under the VMEM budget
    # (conservative enough for v7x's 64 MiB physical VMEM).
    per_row = F * x_itemsize + HIDDEN * out_itemsize
    tb_vmem = max(((vmem_budget_bytes // (2 * per_row)) // sub) * sub, sub)
    tb = min(tb, tb_vmem)

    # Never bigger than the (rounded-up) batch.
    tb = min(tb, _round_up(B, sub))

    # Keep >= 2 tiles whenever there is enough work, so "parallel" batch tiles
    # can actually be split across v7x's two TensorCores.
    if B >= 2 * sub:
        tb = min(tb, _round_up(-(-B // 2), sub))

    return max(tb, sub)


def simscore_forward(x, w_t, b, *, out_dtype=jnp.float32,
                     target_tile_bytes=2 * 1024 * 1024,
                     vmem_budget_bytes=24 * 1024 * 1024):
    """x: [B, F] f32, w_t: [F, 10] f32 (fc1 weight pre-transposed), b: [10] f32.

    Returns sigmoid(x @ w_t + b) as [B, 10] in out_dtype (default f32).
    """
    B, F = x.shape
    x_itemsize = jnp.dtype(x.dtype).itemsize
    out_itemsize = jnp.dtype(out_dtype).itemsize

    TB = _choose_tb(B, F, x_itemsize, out_itemsize,
                    target_tile_bytes=target_tile_bytes,
                    vmem_budget_bytes=vmem_budget_bytes)
    grid = (pl.cdiv(B, TB),)  # partial last block handled by Pallas masking

    b2 = b.reshape(1, HIDDEN).astype(jnp.float32)

    cost = pl.CostEstimate(
        flops=2 * B * F * HIDDEN,
        transcendentals=B * HIDDEN,
        bytes_accessed=(B * F * x_itemsize            # X read
                        + F * HIDDEN * 4 + HIDDEN * 4  # W + bias read
                        + B * HIDDEN * out_itemsize),  # output write
    )

    out = pl.pallas_call(
        simscore_kernel,
        out_shape=jax.ShapeDtypeStruct((B, HIDDEN), out_dtype),
        grid_spec=pltpu.PrefetchScalarGridSpec(
            num_scalar_prefetch=0,
            grid=grid,
            in_specs=[
                pl.BlockSpec((TB, F), lambda i: (i, 0)),        # batch-tiled X
                pl.BlockSpec((F, HIDDEN), lambda i: (0, 0)),    # resident W
                pl.BlockSpec((1, HIDDEN), lambda i: (0, 0)),    # resident bias
            ],
            out_specs=pl.BlockSpec((TB, HIDDEN), lambda i: (i, 0)),
        ),
        compiler_params=pltpu.CompilerParams(
            # batch tiles are independent -> shard across v7x's 2 TCs
            dimension_semantics=("parallel",),
            # <= 48 MiB is safe on v7x (64 MiB physical); plenty on v5e/v6e.
            vmem_limit_bytes=48 * 1024 * 1024,
        ),
        cost_estimate=cost,
    )(x, w_t, b2)

    return out


def init_params(key, num_features):
    """Deterministic init matching SimScoreModel.__init__ shapes."""
    k1, k2, k3, k4 = jax.random.split(key, 4)
    bound1 = 1.0 / jnp.sqrt(num_features)
    # fc1: weight [10, num_features], bias [10]  (PyTorch convention)
    fc1_w = jax.random.uniform(k1, (HIDDEN, num_features), jnp.float32,
                               -bound1, bound1)
    fc1_b = jax.random.uniform(k2, (HIDDEN,), jnp.float32, -bound1, bound1)
    # fc2: defined in __init__ but unused in forward; kept for shape fidelity.
    bound2 = 1.0 / jnp.sqrt(HIDDEN)
    fc2_w = jax.random.uniform(k3, (1, HIDDEN), jnp.float32, -bound2, bound2)
    fc2_b = jax.random.uniform(k4, (1,), jnp.float32, -bound2, bound2)
    return dict(fc1_w=fc1_w, fc1_b=fc1_b, fc2_w=fc2_w, fc2_b=fc2_b)


def _reference(x, w_t, b):
    """Plain-JAX f32 reference (matches PyTorch eval-mode forward)."""
    return jax.nn.sigmoid(jnp.dot(x, w_t) + b)


if __name__ == "__main__":
    key = jax.random.PRNGKey(0)
    kx, kp, kx2 = jax.random.split(key, 3)

    # --- small demo shape (matches the module: Linear(num_features, 10)) ---
    batch, num_features = 8, 32
    x = jax.random.normal(kx, (batch, num_features), jnp.float32)
    params = init_params(kp, num_features)
    w_t = params["fc1_w"].T  # [F, 10]

    out = simscore_forward(x, w_t, params["fc1_b"])
    out = jax.block_until_ready(out)
    assert out.shape == (batch, HIDDEN)
    ref = _reference(x, w_t, params["fc1_b"])
    assert jnp.allclose(out, ref, atol=1e-2), "mismatch vs f32 reference"

    # --- exercise multi-tile grid + masked partial tail block (B % TB != 0) ---
    B2, F2 = 300, 64
    x2 = jax.random.normal(kx2, (B2, F2), jnp.float32)
    params2 = init_params(kp, F2)
    w2_t = params2["fc1_w"].T
    # Tiny tile-byte target forces TB=16 -> grid of 19 tiles with a partial tail.
    out2 = simscore_forward(x2, w2_t, params2["fc1_b"],
                            target_tile_bytes=4096)
    out2 = jax.block_until_ready(out2)
    assert out2.shape == (B2, HIDDEN)
    ref2 = _reference(x2, w2_t, params2["fc1_b"])
    assert jnp.allclose(out2, ref2, atol=1e-2), "mismatch vs reference (tiled)"

    print("KERNEL_OK")
</pallas_src>

<mosaic_0001>
module attributes {stable_mosaic.version = 11 : i64} {
  func.func @simscore_kernel(%arg0: i32, %arg1: memref<8x32xf32, #tpu.memory_space<vmem>>, %arg2: memref<32x10xf32, #tpu.memory_space<vmem>>, %arg3: memref<1x10xf32, #tpu.memory_space<vmem>>, %arg4: memref<8x10xf32, #tpu.memory_space<vmem>>) attributes {dimension_semantics = [#tpu.dimension_semantics<parallel>], iteration_bounds = array<i64: 1>, scalar_prefetch = 0 : i64, scratch_operands = 0 : i64, tpu.core_type = #tpu.core_type<tc>, window_params = [{transform_indices = @transform_0, window_bounds = array<i64: 8, 32>}, {pipeline_mode = #tpu.pipeline_mode<synchronous>, transform_indices = @transform_1, window_bounds = array<i64: 32, 10>}, {pipeline_mode = #tpu.pipeline_mode<synchronous>, transform_indices = @transform_2, window_bounds = array<i64: 1, 10>}, {transform_indices = @transform_3, window_bounds = array<i64: 8, 10>}]} {
    %c0 = arith.constant 0 : index
    %c0_0 = arith.constant 0 : index
    %0 = vector.load %arg1[%c0, %c0_0] : memref<8x32xf32, #tpu.memory_space<vmem>>, vector<8x32xf32>
    %c0_1 = arith.constant 0 : index
    %c0_2 = arith.constant 0 : index
    %1 = vector.load %arg2[%c0_1, %c0_2] : memref<32x10xf32, #tpu.memory_space<vmem>>, vector<32x10xf32>
    %cst = arith.constant dense<0.000000e+00> : vector<8x10xf32>
    %2 = tpu.matmul %0, %1, %cst {dimension_numbers = #tpu.dot_dimension_numbers<[1], [0], [0], [1], [0, 0, 1, 1], [], []>} : vector<8x32xf32>, vector<32x10xf32>, vector<8x10xf32> -> vector<8x10xf32>
    %c0_3 = arith.constant 0 : index
    %c0_4 = arith.constant 0 : index
    %3 = vector.load %arg3[%c0_3, %c0_4] : memref<1x10xf32, #tpu.memory_space<vmem>>, vector<1x10xf32>
    %4 = vector.broadcast %3 : vector<1x10xf32> to vector<8x10xf32>
    %5 = arith.addf %2, %4 : vector<8x10xf32>
    %6 = arith.negf %5 : vector<8x10xf32>
    %7 = math.exp %6 : vector<8x10xf32>
    %cst_5 = arith.constant 1.000000e+00 : f32
    %8 = vector.broadcast %cst_5 : f32 to vector<8x10xf32>
    %9 = arith.addf %8, %7 : vector<8x10xf32>
    %10 = arith.divf %8, %9 : vector<8x10xf32>
    %c0_6 = arith.constant 0 : index
    %c0_7 = arith.constant 0 : index
    %11 = vector.load %arg4[%c0_6, %c0_7] : memref<8x10xf32, #tpu.memory_space<vmem>>, vector<8x10xf32>
    tpu.vector_store %arg4[%c0_6, %c0_7], %10 {strides = array<i32>} : memref<8x10xf32, #tpu.memory_space<vmem>>, vector<8x10xf32>,
    return
  }
  func.func @transform_0(%arg0: i32) -> (i32, i32) {
    %c0_i32 = arith.constant 0 : i32
    %c0_i32_0 = arith.constant 0 : i32
    return %arg0, %c0_i32 : i32, i32
  }
  func.func @transform_1(%arg0: i32) -> (i32, i32) {
    %c0_i32 = arith.constant 0 : i32
    %c0_i32_0 = arith.constant 0 : i32
    %c0_i32_1 = arith.constant 0 : i32
    return %c0_i32, %c0_i32_0 : i32, i32
  }
  func.func @transform_2(%arg0: i32) -> (i32, i32) {
    %c0_i32 = arith.constant 0 : i32
    %c0_i32_0 = arith.constant 0 : i32
    %c0_i32_1 = arith.constant 0 : i32
    return %c0_i32, %c0_i32_0 : i32, i32
  }
  func.func @transform_3(%arg0: i32) -> (i32, i32) {
    %c0_i32 = arith.constant 0 : i32
    %c0_i32_0 = arith.constant 0 : i32
    return %arg0, %c0_i32 : i32, i32
  }
}

</mosaic_0001>

<llo_original>
// kernel: tpu_custom_call.1
$region0: #{tpu_custom_call.1}
  #allocation0 [shape = 'u32[]', space=smem, size = 0x4, offset = 0x4, fixed_abs, tag = 'smem constant byte address 0x4 - core index']
  #allocation1 [shape = 'u32[144,128]{1,0:T(1,128)}', space=vmem, size = 0x12000, scoped, tag = 'internal scratch']
  %s0 = inlined_call_operand.vmem [shape: f32[8,32], index: 0, kind: input, shape index: {}]
  %s1 = inlined_call_operand.vmem [shape: f32[32,10], index: 1, kind: input, shape index: {}]
  %s2 = inlined_call_operand.vmem [shape: f32[1,10], index: 2, kind: input, shape index: {}]
  %s3 = inlined_call_operand.hbm [shape: f32[8,10], index: 3, kind: output, shape index: {}]
  %s4 = sld [smem:[#allocation0]]
  $region22: #{tpu_custom_call.1} parent=0
    _
  %s6 = ssub.s32 1, %s4
  %s7 = scalar_select 0, %s6, %s4
  $region1: #{tpu_custom_call.1} parent=0
    #allocation2 [shape = 'u8[4096]{0}', space=vmem, size = 0x1000, scoped, tag = 'output window, operand 0, single buffered']
    #allocation3 [shape = 's32[1]{0}', space=sflag, size = 0x4, scoped, tag = 'scoped memory for tpu_custom_call.1']
    %8 = vsyncpa [#allocation3], 0
    // Predicated region
    $region2: #{tpu_custom_call.1} parent=1 // pred_check
      _
    $region3: #{tpu_custom_call.1} parent=1 // pred_check_branch
      %10 = sbr.rel (0) target = $region5
    $region4: #{tpu_custom_call.1} parent=1 // pred_region
      _
    $region5: #{tpu_custom_call.1} parent=1 // pred_fallthru
      _
    // Predicated region
    $region6: #{tpu_custom_call.1} parent=1 // pred_check
      _
    $region7: #{tpu_custom_call.1} parent=1 // pred_check_branch
      %12 = sbr.rel (0) target = $region9
    $region8: #{tpu_custom_call.1} parent=1 // pred_region
      _
    $region9: #{tpu_custom_call.1} parent=1 // pred_fallthru
      _
    // Predicated region
    $region10: #{tpu_custom_call.1} parent=1 // pred_check
      _
    $region11: #{tpu_custom_call.1} parent=1 // pred_check_branch
      %14 = sbr.rel (0) target = $region13
    $region12: #{tpu_custom_call.1} parent=1 // pred_region
      _
    $region13: #{tpu_custom_call.1} parent=1 // pred_fallthru
      _
    %v15 = vld [vmem:[%s0] sm:$0xff]
    %v16 = vld [vmem:[%s1] sm:$0xff]
    %v17 = vld [vmem:[%s1 + $0x8] sm:$0xff]
    %v18 = vld [vmem:[%s1 + $0x10] sm:$0xff]
    %v19 = vld [vmem:[%s1 + $0x18] sm:$0xff]
    %v20 = vld [vmem:[%s2] sm:$0x1]
    %v22 = vlaneseq
    %v23 = vshrl.u32 %v22, 7
    %v24 = vsub.s32 0, %v23
    %v25 = vrot.slane %v20, %v24
    %vm27 = vcmask 261120
    %v29 = vsel %vm27, %v15, 0
    %31 = vmatprep.subr.mxu0 0.0
    %32 = vmatpush1.msra.mxu0 %v16
    %33 = vmatprep.subr.mxu0 0.0
    %34 = vmatpush1.msra.mxu0 %v17
    %35 = vmatprep.subr.mxu0 0.0
    %36 = vmatpush1.msra.mxu0 %v18
    %37 = vmatprep.subr.mxu0 0.0
    %38 = vmatpush1.msra.mxu0 %v19
    %39 = vmatprep.subr.mxu0 0.0
    %40 = vmatpush1.msra.mxu0 0.0
    %41 = vmatprep.subr.mxu0 0.0
    %42 = vmatpush1.msra.mxu0 0.0
    %43 = vmatprep.subr.mxu0 0.0
    %44 = vmatpush1.msra.mxu0 0.0
    %45 = vmatprep.subr.mxu0 0.0
    %46 = vmatpush1.msra.mxu0 0.0
    %47 = vmatprep.subr.mxu0 0.0
    %48 = vmatpush1.msra.mxu0 0.0
    %49 = vmatprep.subr.mxu0 0.0
    %50 = vmatpush1.msra.mxu0 0.0
    %51 = vmatprep.subr.mxu0 0.0
    %52 = vmatpush1.msra.mxu0 0.0
    %53 = vmatprep.subr.mxu0 0.0
    %54 = vmatpush1.msra.mxu0 0.0
    %55 = vmatprep.subr.mxu0 0.0
    %56 = vmatpush1.msra.mxu0 0.0
    %57 = vmatprep.subr.mxu0 0.0
    %58 = vmatpush1.msra.mxu0 0.0
    %59 = vmatprep.subr.mxu0 0.0
    %60 = vmatpush1.msra.mxu0 0.0
    %61 = vmatprep.subr.mxu0 0.0
    %62 = vmatpush1.msra.mxu0 0.0
    %63 = vmatprep.subr.mxu0 0.0
    %64 = vmatpush1.msra.mxu0 0.0
    %65 = vmatprep.subr.mxu0 0.0
    %66 = vmatpush1.msra.mxu0 0.0
    %67 = vmatprep.subr.mxu0 0.0
    %68 = vmatpush1.msra.mxu0 0.0
    %69 = vmatprep.subr.mxu0 0.0
    %70 = vmatpush1.msra.mxu0 0.0
    %71 = vmatprep.subr.mxu0 0.0
    %72 = vmatpush1.msra.mxu0 0.0
    %73 = vmatprep.subr.mxu0 0.0
    %74 = vmatpush1.msra.mxu0 0.0
    %75 = vmatprep.subr.mxu0 0.0
    %76 = vmatpush1.msra.mxu0 0.0
    %77 = vmatprep.subr.mxu0 0.0
    %78 = vmatpush1.msra.mxu0 0.0
    %79 = vmatprep.subr.mxu0 0.0
    %80 = vmatpush1.msra.mxu0 0.0
    %81 = vmatprep.subr.mxu0 0.0
    %82 = vmatpush1.msra.mxu0 0.0
    %83 = vmatprep.subr.mxu0 0.0
    %84 = vmatpush1.msra.mxu0 0.0
    %85 = vmatprep.subr.mxu0 0.0
    %86 = vmatpush1.msra.mxu0 0.0
    %87 = vmatprep.subr.mxu0 0.0
    %88 = vmatpush1.msra.mxu0 0.0
    %89 = vmatprep.subr.mxu0 0.0
    %90 = vmatpush1.msra.mxu0 0.0
    %91 = vmatprep.subr.mxu0 0.0
    %92 = vmatpush1.msra.mxu0 0.0
    %93 = vmatprep.subr.mxu0 0.0
    %94 = vmatpush1.msra.mxu0 0.0
    %95 = vmatprep.mubr.f32.mxu0 0.0
    %96 = vmatmul.mubr.f32.gmra.mrb[0].mxu0 %v29
    %v97 = vpop.f32.mrb[0].mxu0
    %v98 = vadd.f32 %v25, %v97
    %v99 = vpop.f32.mrb[0].mxu0
    %100 = vdwg.mxu0
    %v101 = vxor.u32 %v98, 2147483648
    %v102 = vmul.f32 %v101, 1.442695
    %v103 = vpow.pop %v102
    %v104 = vadd.f32 %v103, 1.0
    %v105 = vrcp.pop %v104
    %v106 = vmul.f32 1.0, %v105
    %vm107 = vcmask 80896
    %108 = vst.msk [vmem:[#allocation2] sm:$0xff] %vm107, %v106
    // Predicated region
    $region14: #{tpu_custom_call.1} parent=1 // pred_check
      _
    $region15: #{tpu_custom_call.1} parent=1 // pred_check_branch
      %110 = sbr.rel (0) target = $region17
    $region16: #{tpu_custom_call.1} parent=1 // pred_region
      %s112 = ssub.s32 128, 128
      %113 = vsyncadd [#allocation3], %s112
      %s115 = sshll.u32 [#allocation2], 4
      %s116 = int_to_ptr.vmem [resolvable:$true] %s115
      %118 = dma.vmem_to_hbm [thread:$0]  %s116, 128, %s3, [#allocation3]
    $region17: #{tpu_custom_call.1} parent=1 // pred_fallthru
      _
    // Predicated region
    $region18: #{tpu_custom_call.1} parent=1 // pred_check
      _
    $region19: #{tpu_custom_call.1} parent=1 // pred_check_branch
      %120 = sbr.rel (0) target = $region21
    $region20: #{tpu_custom_call.1} parent=1 // pred_region
      %121 = dma.done [#allocation3], 128
    $region21: #{tpu_custom_call.1} parent=1 // pred_fallthru
      _
    %122 = vsyncpa [#allocation3], 1

</llo_original>
